<compile_context>
chip_gen: v7x
topology: tpu7x:2x2x1
jax: 0.10.0
libtpu: 0.0.40
codegen_flags: <defaults>
</compile_context>

<pallas_src>
import jax
import jax.numpy as jnp
from jax.experimental import pallas as pl
from jax.experimental.pallas import tpu as pltpu


def _round_up(x: int, m: int) -> int:
    return ((x + m - 1) // m) * m


def _multitask_nll_kernel(scale_ref, pred_ref, tgt_ref, o_ref):
    # scale_ref: (S,) f32 in SMEM           -- weight_s / n_s per study
    # pred_ref:  (C_pad, N_pad) log-probs   -- classes on sublanes, batch on lanes
    # tgt_ref:   (1, N_pad) int32           -- class id per sample, -1 for padding
    # o_ref:     (1, 128) f32               -- lane-dense per-study loss row
    s = pl.program_id(0)
    pred = pred_ref[...].astype(jnp.float32)          # upcast in-kernel (free on VPU)
    tgt = tgt_ref[...]                                # (1, N_pad), broadcasts on sublanes
    cls = jax.lax.broadcasted_iota(jnp.int32, pred.shape, 0)
    # One-hot gather of pred[target[i], i]; padded lanes (tgt == -1) never match.
    picked_sum = jnp.sum(jnp.where(cls == tgt, pred, 0.0))
    loss = -picked_sum * scale_ref[s]
    o_ref[...] = jnp.full(o_ref.shape, loss, dtype=o_ref.dtype)


class MultiTaskLoss:
    """JAX/Pallas port of cogspaces MultiTaskLoss (fused, single kernel launch)."""

    def __init__(self, study_weights):
        self.study_weights = dict(study_weights)

    def __call__(self, inputs, targets):
        studies = list(inputs.keys())
        num_s = len(studies)

        n_max = max(int(inputs[s].shape[0]) for s in studies)
        c_max = max(int(inputs[s].shape[1]) for s in studies)
        n_pad = _round_up(max(n_max, 1), 128)   # batch -> lanes
        c_pad = _round_up(max(c_max, 1), 8)     # classes -> sublanes

        pred_dtype = jnp.result_type(*[inputs[s].dtype for s in studies])

        preds, tgts, scales = [], [], []
        for s in studies:
            p = inputs[s].astype(pred_dtype)            # (N, C) log-probs
            n, c = p.shape
            # Lane-dense layout: (C, N), padded once in the wrapper.
            p_t = jnp.pad(p.T, ((0, c_pad - c), (0, n_pad - n)))
            t = targets[s][:, 1].astype(jnp.int32)
            t = jnp.pad(t, (0, n_pad - n), constant_values=-1)
            preds.append(p_t)
            tgts.append(t.reshape(1, n_pad))
            scales.append(float(self.study_weights[s]) / float(n))

        pred_stack = jnp.stack(preds)                         # (S, C_pad, N_pad)
        tgt_stack = jnp.stack(tgts)                           # (S, 1, N_pad)
        scale = jnp.asarray(scales, dtype=jnp.float32)        # (S,)

        per_study = pl.pallas_call(
            _multitask_nll_kernel,
            out_shape=jax.ShapeDtypeStruct((num_s, 1, 128), jnp.float32),
            grid=(num_s,),
            in_specs=[
                pl.BlockSpec(memory_space=pltpu.MemorySpace.SMEM),       # scale (S,)
                pl.BlockSpec((None, c_pad, n_pad), lambda s: (s, 0, 0)),  # pred
                pl.BlockSpec((None, 1, n_pad), lambda s: (s, 0, 0)),      # target
            ],
            out_specs=pl.BlockSpec((None, 1, 128), lambda s: (s, 0, 0)),
            compiler_params=pltpu.CompilerParams(
                dimension_semantics=("parallel",)),
        )(scale, pred_stack, tgt_stack)

        # One tiny reduction over the handful of per-study losses.
        return jnp.sum(per_study[:, 0, 0])


def _reference_loss(inputs, targets, study_weights):
    """Pure-JAX reference for correctness checking."""
    loss = jnp.float32(0.0)
    for study in inputs:
        pred = inputs[study].astype(jnp.float32)
        tgt = targets[study][:, 1]
        picked = jnp.take_along_axis(pred, tgt[:, None].astype(jnp.int32),
                                     axis=1)[:, 0]
        loss = loss + (-jnp.mean(picked)) * jnp.float32(study_weights[study])
    return loss


if __name__ == "__main__":
    key = jax.random.PRNGKey(0)

    # Two small "studies" with different batch / class counts.
    study_cfg = {"archi": (16, 8), "hcp": (8, 5)}
    study_weights = {"archi": 0.7, "hcp": 1.3}

    inputs = {}
    targets = {}
    for study, (n, c) in study_cfg.items():
        key, k_logit, k_tgt = jax.random.split(key, 3)
        logits = jax.random.normal(k_logit, (n, c), dtype=jnp.float32)
        inputs[study] = jax.nn.log_softmax(logits, axis=-1)
        cls = jax.random.randint(k_tgt, (n,), 0, c, dtype=jnp.int32)
        # column 0 mimics the "subject" column in cogspaces targets.
        targets[study] = jnp.stack([jnp.zeros_like(cls), cls], axis=1)

    loss_fn = MultiTaskLoss(study_weights)
    loss = jax.block_until_ready(loss_fn(inputs, targets))

    ref = jax.block_until_ready(_reference_loss(inputs, targets, study_weights))
    assert jnp.allclose(loss, ref, rtol=1e-5, atol=1e-5), (loss, ref)

    print("KERNEL_OK")
</pallas_src>

<mosaic_0001>
module attributes {stable_mosaic.version = 11 : i64} {
  func.func @_multitask_nll_kernel(%arg0: i32, %arg1: memref<2xf32, #tpu.memory_space<smem>>, %arg2: memref<1x8x128xf32, #tpu.memory_space<vmem>>, %arg3: memref<1x1x128xi32, #tpu.memory_space<vmem>>, %arg4: memref<1x1x128xf32, #tpu.memory_space<vmem>>) attributes {dimension_semantics = [#tpu.dimension_semantics<parallel>], iteration_bounds = array<i64: 2>, scalar_prefetch = 0 : i64, scratch_operands = 0 : i64, tpu.core_type = #tpu.core_type<tc>, window_params = [{transform_indices = @transform_0, window_bounds = array<i64: 2>}, {transform_indices = @transform_1, window_bounds = array<i64: 1, 8, 128>}, {transform_indices = @transform_2, window_bounds = array<i64: 1, 1, 128>}, {transform_indices = @transform_3, window_bounds = array<i64: 1, 1, 128>}]} {
    %c0 = arith.constant 0 : index
    %c0_0 = arith.constant 0 : index
    %c0_1 = arith.constant 0 : index
    %0 = vector.load %arg2[%c0, %c0_0, %c0_1] : memref<1x8x128xf32, #tpu.memory_space<vmem>>, vector<1x8x128xf32>
    %1 = vector.shape_cast %0 : vector<1x8x128xf32> to vector<8x128xf32>
    %c0_2 = arith.constant 0 : index
    %c0_3 = arith.constant 0 : index
    %c0_4 = arith.constant 0 : index
    %2 = vector.load %arg3[%c0_2, %c0_3, %c0_4] : memref<1x1x128xi32, #tpu.memory_space<vmem>>, vector<1x1x128xi32>
    %3 = vector.shape_cast %2 : vector<1x1x128xi32> to vector<1x128xi32>
    %4 = tpu.iota {dimensions = array<i32: 0>} : vector<8x128xi32>
    %5 = vector.broadcast %3 : vector<1x128xi32> to vector<8x128xi32>
    %6 = arith.cmpi eq, %4, %5 : vector<8x128xi32>
    %cst = arith.constant 0.000000e+00 : f32
    %7 = vector.broadcast %cst : f32 to vector<8x128xf32>
    %8 = arith.select %6, %1, %7 : vector<8x128xi1>, vector<8x128xf32>
    %9 = vector.shape_cast %8 : vector<8x128xf32> to vector<1x8x128xf32>
    %cst_5 = arith.constant dense<0.000000e+00> : vector<1xf32>
    %10 = vector.multi_reduction <add>, %9, %cst_5 [1, 2] : vector<1x8x128xf32> to vector<1xf32>
    %11 = vector.shape_cast %10 : vector<1xf32> to vector<1x1x1xf32>
    %12 = vector.extract %11[0, 0, 0] : f32 from vector<1x1x1xf32>
    %cst_6 = arith.constant 0.000000e+00 : f32
    %13 = arith.subf %cst_6, %12 : f32
    %14 = arith.index_cast %arg0 : i32 to index
    %15 = memref.load %arg1[%14] : memref<2xf32, #tpu.memory_space<smem>>
    %16 = arith.mulf %13, %15 : f32
    %17 = vector.broadcast %16 : f32 to vector<1x128xf32>
    %c0_7 = arith.constant 0 : index
    %c0_8 = arith.constant 0 : index
    %c0_9 = arith.constant 0 : index
    %18 = vector.load %arg4[%c0_7, %c0_8, %c0_9] : memref<1x1x128xf32, #tpu.memory_space<vmem>>, vector<1x1x128xf32>
    %19 = vector.shape_cast %18 : vector<1x1x128xf32> to vector<1x128xf32>
    %20 = vector.shape_cast %17 : vector<1x128xf32> to vector<1x1x128xf32>
    tpu.vector_store %arg4[%c0_7, %c0_8, %c0_9], %20 {strides = array<i32>} : memref<1x1x128xf32, #tpu.memory_space<vmem>>, vector<1x1x128xf32>,
    return
  }
  func.func @transform_0(%arg0: i32) -> i32 {
    %c0_i32 = arith.constant 0 : i32
    %c0_i32_0 = arith.constant 0 : i32
    return %c0_i32 : i32
  }
  func.func @transform_1(%arg0: i32) -> (i32, i32, i32) {
    %c0_i32 = arith.constant 0 : i32
    %c0_i32_0 = arith.constant 0 : i32
    %c0_i32_1 = arith.constant 0 : i32
    return %arg0, %c0_i32, %c0_i32_0 : i32, i32, i32
  }
  func.func @transform_2(%arg0: i32) -> (i32, i32, i32) {
    %c0_i32 = arith.constant 0 : i32
    %c0_i32_0 = arith.constant 0 : i32
    %c0_i32_1 = arith.constant 0 : i32
    return %arg0, %c0_i32, %c0_i32_0 : i32, i32, i32
  }
  func.func @transform_3(%arg0: i32) -> (i32, i32, i32) {
    %c0_i32 = arith.constant 0 : i32
    %c0_i32_0 = arith.constant 0 : i32
    %c0_i32_1 = arith.constant 0 : i32
    return %arg0, %c0_i32, %c0_i32_0 : i32, i32, i32
  }
}

</mosaic_0001>

<llo_original>
// kernel: tpu_custom_call.1
$region0: #{tpu_custom_call.1}
  #allocation0 [shape = 'u32[]', space=smem, size = 0x4, offset = 0x4, fixed_abs, tag = 'smem constant byte address 0x4 - core index']
  #allocation1 [shape = 'u32[144,128]{1,0:T(1,128)}', space=vmem, size = 0x12000, scoped, tag = 'internal scratch']
  %s0 = inlined_call_operand.hbm [shape: f32[2], index: 0, kind: input, shape index: {}]
  %s1 = inlined_call_operand.hbm [shape: f32[2,8,128], index: 1, kind: input, shape index: {}]
  %s2 = inlined_call_operand.vmem [shape: s32[2,1,128], index: 2, kind: input, shape index: {}]
  %s3 = inlined_call_operand.hbm [shape: f32[2,1,128], index: 3, kind: output, shape index: {}]
  %s4 = sld [smem:[#allocation0]]
  $region53: #{tpu_custom_call.1} parent=0
    _
  %s6 = ssub.s32 1, %s4
  %s7 = scalar_select 0, %s6, %s4
  $region1: #{tpu_custom_call.1} parent=0
    #allocation2 [shape = 'u8[512]{0}', space=smem, size = 0x200, scoped, tag = 'input window, operand 0, single buffered']
    #allocation3 [shape = 's32[2]{0}', space=sflag, size = 0x8, scoped, tag = 'scoped memory for tpu_custom_call.1']
    #allocation4 [shape = 's32[2]{0}', space=sflag, size = 0x8, scoped, tag = 'scoped memory for tpu_custom_call.1']
    #allocation5 [shape = 's32[2]{0}', space=sflag, size = 0x8, scoped, tag = 'scoped memory for tpu_custom_call.1']
    #allocation6 [shape = 'u8[8192]{0}', space=vmem, size = 0x2000, scoped, tag = 'input window, operand 1']
    #allocation7 [shape = 'u8[1024]{0}', space=vmem, size = 0x400, scoped, tag = 'output window, operand 0']
    %8 = vsyncpa [#allocation5], 0
    %9 = vsyncpa [#allocation3], 0
    %s10 = scalar_lea.sflag [#allocation3], 1
    %11 = vsyncpa %s10, 0
    %12 = vsyncpa [#allocation4], 0
    %s13 = scalar_lea.sflag [#allocation4], 1
    %14 = vsyncpa %s13, 0
    loop: start=0, step=1, limit=4
    $region2: #{tpu_custom_call.1} parent=1 // loop_pre_header
      _
    $region3: #{tpu_custom_call.1} parent=1 // loop_header
      %s16 = sphi 0, %s20
      %p17 = scmp.ge.s32.totalorder %s16, 4
      %s24 = sphi 0, %s24
      %s26 = sphi 0, %s24
      %s27 = sphi 0, %s26
      %s41 = sphi 0, %s27
      %s47 = sphi 0, %s49
      %s50 = sphi 0, %s47
      %s51 = sphi 0, %s50
      %s67 = sphi 0, %s51
      %s73 = sphi 0, %s75
      %s76 = sphi 0, %s73
      %s77 = sphi 0, %s76
      %s93 = sphi 0, %s77
      %s99 = sphi 0, %s101
      %s102 = sphi 0, %s99
      %s103 = sphi 0, %s102
      %s119 = sphi 0, %s103
    $region4: #{tpu_custom_call.1} parent=1 // loop_header_branch
      %19 = sbr.rel (%p17) target = $region8
    $region5: #{tpu_custom_call.1} parent=1 // loop_body
      %s21 = ssub.s32 %s16, 1
      %s22 = ssub.s32 %s16, 2
      %s23 = sadd.s32 %s16, 1
      %s25 = sadd.s32 %s24, 1
      %p28 = scmp.eq.s32.totalorder %s16, 1
      %p29 = scmp.ne.s32.totalorder %s24, %s26
      %p30 = scmp.eq.s32.totalorder %s16, 0
      %p31 = por %p29, %p30
      %p32 = scmp.ne.s32.totalorder %s24, %s26
      %p33 = scmp.eq.s32.totalorder %s21, 1
      %p34 = por %p32, %p33
      %p35 = scmp.ne.s32.totalorder %s26, %s27
      %p36 = scmp.eq.s32.totalorder %s21, 0
      %p37 = por %p35, %p36
      %p38 = scmp.ne.s32.totalorder %s26, %s27
      %p39 = scmp.eq.s32.totalorder %s22, 1
      %p40 = por %p38, %p39
      %p42 = scmp.ne.s32.totalorder %s27, %s41
      %p43 = scmp.eq.s32.totalorder %s22, 0
      %p44 = por %p42, %p43
      %s45 = ssub.s32 %s16, %s23
      %p46 = scmp.eq.s32.totalorder %s45, 0
      %s48 = sadd.s32 %s47, 1
      %s49 = scalar_select %p46, %s47, %s48
      %p52 = pneg %p46
      %p53 = scmp.eq.s32.totalorder %s16, 1
      %p54 = por %p52, %p53
      %p55 = scmp.ne.s32.totalorder %s47, %s50
      %p56 = scmp.eq.s32.totalorder %s16, 0
      %p57 = por %p55, %p56
      %p58 = scmp.ne.s32.totalorder %s47, %s50
      %p59 = scmp.eq.s32.totalorder %s21, 1
      %p60 = por %p58, %p59
      %p61 = scmp.ne.s32.totalorder %s50, %s51
      %p62 = scmp.eq.s32.totalorder %s21, 0
      %p63 = por %p61, %p62
      %p64 = scmp.ne.s32.totalorder %s50, %s51
      %p65 = scmp.eq.s32.totalorder %s22, 1
      %p66 = por %p64, %p65
      %p68 = scmp.ne.s32.totalorder %s51, %s67
      %p69 = scmp.eq.s32.totalorder %s22, 0
      %p70 = por %p68, %p69
      %s71 = ssub.s32 %s16, %s23
      %p72 = scmp.eq.s32.totalorder %s71, 0
      %s74 = sadd.s32 %s73, 1
      %s75 = scalar_select %p72, %s73, %s74
      %p78 = pneg %p72
      %p79 = scmp.eq.s32.totalorder %s16, 1
      %p80 = por %p78, %p79
      %p81 = scmp.ne.s32.totalorder %s73, %s76
      %p82 = scmp.eq.s32.totalorder %s16, 0
      %p83 = por %p81, %p82
      %p84 = scmp.ne.s32.totalorder %s73, %s76
      %p85 = scmp.eq.s32.totalorder %s21, 1
      %p86 = por %p84, %p85
      %p87 = scmp.ne.s32.totalorder %s76, %s77
      %p88 = scmp.eq.s32.totalorder %s21, 0
      %p89 = por %p87, %p88
      %p90 = scmp.ne.s32.totalorder %s76, %s77
      %p91 = scmp.eq.s32.totalorder %s22, 1
      %p92 = por %p90, %p91
      %p94 = scmp.ne.s32.totalorder %s77, %s93
      %p95 = scmp.eq.s32.totalorder %s22, 0
      %p96 = por %p94, %p95
      %s97 = ssub.s32 %s16, %s23
      %p98 = scmp.eq.s32.totalorder %s97, 0
      %s100 = sadd.s32 %s99, 1
      %s101 = scalar_select %p98, %s99, %s100
      %p104 = pneg %p98
      %p105 = scmp.eq.s32.totalorder %s16, 1
      %p106 = por %p104, %p105
      %p107 = scmp.ne.s32.totalorder %s99, %s102
      %p108 = scmp.eq.s32.totalorder %s16, 0
      %p109 = por %p107, %p108
      %p110 = scmp.ne.s32.totalorder %s99, %s102
      %p111 = scmp.eq.s32.totalorder %s21, 1
      %p112 = por %p110, %p111
      %p113 = scmp.ne.s32.totalorder %s102, %s103
      %p114 = scmp.eq.s32.totalorder %s21, 0
      %p115 = por %p113, %p114
      %p116 = scmp.ne.s32.totalorder %s102, %s103
      %p117 = scmp.eq.s32.totalorder %s22, 1
      %p118 = por %p116, %p117
      %p120 = scmp.ne.s32.totalorder %s103, %s119
      %p121 = scmp.eq.s32.totalorder %s22, 0
      %p122 = por %p120, %p121
      %p123 = scmp.le.s32.totalorder 1, %s16
      %p124 = scmp.lt.s32.totalorder %s16, 3
      %p125 = pnand %p123, %p124
      %p126 = pneg %p125
      // Predicated region
      $region9: #{tpu_custom_call.1} parent=5 // pred_check
        _
      $region10: #{tpu_custom_call.1} parent=5 // pred_check_branch
        %128 = sbr.rel (%p125) target = $region12
      $region11: #{tpu_custom_call.1} parent=5 // pred_region
        %s129 = ssub.s32 %s16, 1
        // Predicated region
        $region13: #{tpu_custom_call.1} parent=11 // pred_check
          %p130 = pneg %p37
        $region14: #{tpu_custom_call.1} parent=11 // pred_check_branch
          %132 = sbr.rel (%p130) target = $region16
        $region15: #{tpu_custom_call.1} parent=11 // pred_region
          %s134 = ssub.s32 16, 16
          %135 = vsyncadd [#allocation5], %s134
          %138 = dma.hbm_to_smem %s0, 16, [#allocation2], [#allocation5]
        $region16: #{tpu_custom_call.1} parent=11 // pred_fallthru
          _
      $region12: #{tpu_custom_call.1} parent=5 // pred_fallthru
        _
      %p139 = scmp.lt.s32.totalorder %s16, 2
      // Predicated region
      $region17: #{tpu_custom_call.1} parent=5 // pred_check
        %p140 = pneg %p139
      $region18: #{tpu_custom_call.1} parent=5 // pred_check_branch
        %142 = sbr.rel (%p140) target = $region20
      $region19: #{tpu_custom_call.1} parent=5 // pred_region
        // Predicated region
        $region21: #{tpu_custom_call.1} parent=19 // pred_check
          %p143 = pneg %p57
        $region22: #{tpu_custom_call.1} parent=19 // pred_check_branch
          %145 = sbr.rel (%p143) target = $region24
        $region23: #{tpu_custom_call.1} parent=19 // pred_region
          %s146 = sand.u32 %s47, 1
          %s147 = scalar_lea.sflag [#allocation3], %s146
          %s148 = sand.u32 %s47, 1
          %s149 = smul.addr %s148, 8
          %s150 = scalar_lea.vmem [#allocation6], %s149
          %s152 = ssub.s32 128, 128
          %153 = vsyncadd %s147, %s152
          %s154 = smul.addr %s16, 128
          %s155 = scalar_lea.hbm %s1, %s154
          %s157 = sshll.u32 %s150, 4
          %s158 = int_to_ptr.vmem [resolvable:$true] %s157
          %160 = dma.hbm_to_vmem [thread:$0]  %s155, 128, %s158, %s147
        $region24: #{tpu_custom_call.1} parent=19 // pred_fallthru
          _
        // Predicated region
        $region25: #{tpu_custom_call.1} parent=19 // pred_check
          %p161 = pneg %p83
        $region26: #{tpu_custom_call.1} parent=19 // pred_check_branch
          %163 = sbr.rel (%p161) target = $region28
        $region27: #{tpu_custom_call.1} parent=19 // pred_region
          %p164 = scmp.lt.s32.totalorder %s16, 1
          %s165 = scalar_select %p164, %s16, 1
          %s166 = scalar_lea.vmem %s2, %s165
        $region28: #{tpu_custom_call.1} parent=19 // pred_fallthru
          _
      $region20: #{tpu_custom_call.1} parent=5 // pred_fallthru
        _
      %p167 = scmp.le.s32.totalorder 1, %s16
      %p168 = scmp.lt.s32.totalorder %s16, 3
      %p169 = pnand %p167, %p168
      %p170 = pneg %p169
      // Predicated region
      $region29: #{tpu_custom_call.1} parent=5 // pred_check
        _
      $region30: #{tpu_custom_call.1} parent=5 // pred_check_branch
        %172 = sbr.rel (%p169) target = $region32
      $region31: #{tpu_custom_call.1} parent=5 // pred_region
        %s173 = ssub.s32 %s16, 1
        // Predicated region
        $region33: #{tpu_custom_call.1} parent=31 // pred_check
          %p174 = pneg %p37
        $region34: #{tpu_custom_call.1} parent=31 // pred_check_branch
          %176 = sbr.rel (%p174) target = $region36
        $region35: #{tpu_custom_call.1} parent=31 // pred_region
          %177 = dma.done [#allocation5], 16
        $region36: #{tpu_custom_call.1} parent=31 // pred_fallthru
          _
        %s178 = sand.u32 %s50, 1
        %s179 = scalar_lea.sflag [#allocation3], %s178
        %s180 = sand.u32 %s50, 1
        %s181 = smul.addr %s180, 8
        %s182 = scalar_lea.vmem [#allocation6], %s181
        // Predicated region
        $region37: #{tpu_custom_call.1} parent=31 // pred_check
          %p183 = pneg %p63
        $region38: #{tpu_custom_call.1} parent=31 // pred_check_branch
          %185 = sbr.rel (%p183) target = $region40
        $region39: #{tpu_custom_call.1} parent=31 // pred_region
          %186 = dma.done %s179, 128
        $region40: #{tpu_custom_call.1} parent=31 // pred_fallthru
          _
        %187 = sfence
        %p188 = pneg %p37
        %p189 = pneg %p34
        %s190 = sand.u32 %s50, 1
        %s191 = scalar_lea.sflag [#allocation3], %s190
        %s192 = sand.u32 %s50, 1
        %s193 = smul.addr %s192, 8
        %s194 = scalar_lea.vmem [#allocation6], %s193
        %p195 = pneg %p63
        %p196 = pneg %p60
        %p197 = scmp.lt.s32.totalorder %s21, 1
        %s198 = scalar_select %p197, %s21, 1
        %s199 = scalar_lea.vmem %s2, %s198
        %p200 = pneg %p89
        %p201 = pneg %p86
        %p202 = pneg %p115
        %p203 = pneg %p112
        %s204 = sand.u32 %s102, 1
        %s205 = scalar_lea.sflag [#allocation4], %s204
        %s206 = sand.u32 %s102, 1
        %s207 = scalar_lea.vmem [#allocation7], %s206
        %p208 = scmp.lt.s32.totalorder %s21, 1
        %s209 = scalar_select %p208, %s21, 1
        %s210 = scalar_lea.vmem %s2, %s209
        %v211 = vld [vmem:[%s182] sm:$0xff]
        %v212 = vld [vmem:[%s210] sm:$0x1]
        %v213 = vlaneseq
        %v214 = vshrl.u32 %v213, 7
        %v215 = vlaneseq
        %v216 = vshrl.u32 %v215, 7
        %v217 = vsub.s32 0, %v216
        %v218 = vrot.slane %v212, %v217
        %vm219 = vcmp.eq.s32.totalorder %v214, %v218
        %v220 = vsel %vm219, %v211, 0.0
        %221 = vadd.xlane.f32.xlu0 %v220
        %v222 = vpop.xlane.xlu0 %221
        %v223 = vrot.slane %v222, 4
        %v224 = vadd.f32 %v222, %v223
        %v225 = vrot.slane %v224, 2
        %v226 = vadd.f32 %v224, %v225
        %v227 = vrot.slane %v226, 1
        %v228 = vadd.f32 %v226, %v227
        %s229 = vtos %v228
        %s230 = ssub.f32 0.0, %s229
        %s231 = sld [smem:[#allocation2 + %s21]]
        %s232 = smul.f32 %s230, %s231
        %v233 = vstv %s232
        %234 = vst [vmem:[%s207] sm:$0x1] %v233
        %s235 = sand.u32 %s102, 1
        %s236 = scalar_lea.sflag [#allocation4], %s235
        %s237 = sand.u32 %s102, 1
        %s238 = scalar_lea.vmem [#allocation7], %s237
        // Predicated region
        $region41: #{tpu_custom_call.1} parent=31 // pred_check
          %p239 = pneg %p112
        $region42: #{tpu_custom_call.1} parent=31 // pred_check_branch
          %241 = sbr.rel (%p239) target = $region44
        $region43: #{tpu_custom_call.1} parent=31 // pred_region
          %s243 = ssub.s32 16, 16
          %244 = vsyncadd %s236, %s243
          %s245 = smul.addr %s21, 16
          %s246 = scalar_lea.hbm %s3, %s245
          %s248 = sshll.u32 %s238, 4
          %s249 = int_to_ptr.vmem [resolvable:$true] %s248
          %251 = dma.vmem_to_hbm [thread:$0]  %s249, 16, %s246, %s236
        $region44: #{tpu_custom_call.1} parent=31 // pred_fallthru
          _
      $region32: #{tpu_custom_call.1} parent=5 // pred_fallthru
        _
      %p252 = scmp.le.s32.totalorder 2, %s16
      // Predicated region
      $region45: #{tpu_custom_call.1} parent=5 // pred_check
        %p253 = pneg %p252
      $region46: #{tpu_custom_call.1} parent=5 // pred_check_branch
        %255 = sbr.rel (%p253) target = $region48
      $region47: #{tpu_custom_call.1} parent=5 // pred_region
        %s256 = ssub.s32 %s16, 2
        // Predicated region
        $region49: #{tpu_custom_call.1} parent=47 // pred_check
          %p257 = pneg %p118
        $region50: #{tpu_custom_call.1} parent=47 // pred_check_branch
          %259 = sbr.rel (%p257) target = $region52
        $region51: #{tpu_custom_call.1} parent=47 // pred_region
          %s260 = sand.u32 %s103, 1
          %s261 = scalar_lea.sflag [#allocation4], %s260
          %s262 = sand.u32 %s103, 1
          %s263 = scalar_lea.vmem [#allocation7], %s262
          %264 = dma.done %s261, 16
        $region52: #{tpu_custom_call.1} parent=47 // pred_fallthru
          _
      $region48: #{tpu_custom_call.1} parent=5 // pred_fallthru
        _
    $region6: #{tpu_custom_call.1} parent=1 // loop_footer
      %s20 = sadd.s32 1, %s16
    $region7: #{tpu_custom_call.1} parent=1 // loop_footer_branch
      %15 = sbr.rel target = $region3
    $region8: #{tpu_custom_call.1} parent=1 // loop_exit
      _
    %265 = vsyncpa [#allocation3], 1
    %s266 = scalar_lea.sflag [#allocation3], 1
    %267 = vsyncpa %s266, 1
    %268 = vsyncpa [#allocation4], 1
    %s269 = scalar_lea.sflag [#allocation4], 1
    %270 = vsyncpa %s269, 1
    %271 = vsyncpa [#allocation5], 1
    %s272 = scalar_lea.sflag [#allocation5], 1
    %273 = vsyncpa %s272, 1

</llo_original>
